<compile_context>
chip_gen: v7x
topology: tpu7x:2x2x1
jax: 0.10.0
libtpu: 0.0.40
codegen_flags: <defaults>
</compile_context>

<pallas_src>
import jax
import jax.numpy as jnp
from jax import lax
from jax.experimental import pallas as pl
from jax.experimental.pallas import tpu as pltpu

HIDDEN = 30
LANE = 128


def critic_kernel(x_ref, w1_ref, b1_ref, w2_ref, b2_ref, out_ref):
    # x_ref:  (TB, s_dim)      batch-major tile (native layout)
    # w1_ref: (HIDDEN, s_dim)  b1_ref: (HIDDEN, 1)
    # w2_ref: (1, HIDDEN)      b2_ref: (1, 1) in SMEM
    # out_ref:(1, TB)          batch on lanes -> lane-dense stores
    # fc1: h[j, b] = sum_d W1[j, d] * x[b, d]  (contract the feature axis of
    # both operands; batch lands on the lane axis of the MXU result)
    h = lax.dot_general(
        w1_ref[...], x_ref[...],
        dimension_numbers=(((1,), (1,)), ((), ())),
        preferred_element_type=jnp.float32)
    h = jnp.maximum(h + b1_ref[...], 0.0)   # bias bcast over lanes + relu (VPU)
    # out: W2 @ h + b2 -> (1, TB)
    v = jnp.dot(w2_ref[...], h, preferred_element_type=jnp.float32)
    out_ref[...] = (v + b2_ref[0, 0]).astype(out_ref.dtype)


def _round_up(x, m):
    return -(-x // m) * m


def _choose_tiling(batch, tb):
    """Pick (padded batch, batch tile) — both multiples of 128.

    `tb` is an upper bound on the batch tile.  Tiny batches get exactly one
    block; larger batches get at least two blocks so a v7x chip's two
    TensorCores both receive work on the "parallel" grid axis.
    """
    tb = max(LANE, (tb // LANE) * LANE)
    b_lane = max(LANE, _round_up(batch, LANE))
    if b_lane <= 2 * LANE:
        return b_lane, b_lane
    half = _round_up(b_lane, 2 * LANE) // 2       # ~half the batch, lane-aligned
    tb_eff = max(LANE, min(tb, half))
    b_pad = _round_up(batch, tb_eff)
    return b_pad, tb_eff


def _critic_forward_impl(x, w1, b1, w2, b2, *, tb=2048):
    """x: (B, s_dim) f32; params in PyTorch nn.Linear layout:
       w1: (HIDDEN, s_dim), b1: (HIDDEN,), w2: (1, HIDDEN), b2: (1,)
       returns (B, 1) f32 — same semantics as CriticNet.forward.
       `tb` is a static upper bound on the batch tile (rounded to 128)."""
    B, s_dim = x.shape
    b_pad, tb_eff = _choose_tiling(B, tb)
    n_blocks = b_pad // tb_eff

    # Row-pad only when needed.  Padded rows produce junk values (biases pass
    # through relu), which are sliced off below, so nothing leaks.
    if b_pad != B:
        x_in = jnp.zeros((b_pad, s_dim), x.dtype).at[:B, :].set(x)
    else:
        x_in = x
    b1c = b1.reshape(HIDDEN, 1).astype(jnp.float32)
    b2c = b2.reshape(1, 1).astype(jnp.float32)

    out_t = pl.pallas_call(
        critic_kernel,
        out_shape=jax.ShapeDtypeStruct((1, b_pad), jnp.float32),
        grid=(n_blocks,),
        in_specs=[
            # x tile: pipelined over the batch grid, native (B, s_dim) layout.
            pl.BlockSpec((tb_eff, s_dim), lambda i: (i, 0)),
            # Weights/biases: whole-array VMEM residents — loaded once, not
            # double-buffered, no per-grid-step copy bookkeeping.
            pl.BlockSpec(memory_space=pltpu.MemorySpace.VMEM),   # W1
            pl.BlockSpec(memory_space=pltpu.MemorySpace.VMEM),   # b1
            pl.BlockSpec(memory_space=pltpu.MemorySpace.VMEM),   # W2
            pl.BlockSpec(memory_space=pltpu.MemorySpace.SMEM),   # b2 scalar
        ],
        out_specs=pl.BlockSpec((1, tb_eff), lambda i: (0, i)),
        compiler_params=pltpu.CompilerParams(
            dimension_semantics=("parallel",)),
    )(x_in, w1, b1c, w2, b2c)

    # Back to PyTorch's (B, 1), dropping padded batch columns.
    return out_t[:, :B].T


# One dispatch for pad + pallas_call + slice/transpose.
critic_forward = jax.jit(_critic_forward_impl, static_argnames=("tb",))


def init_params(key, s_dim):
    """Deterministic init in PyTorch nn.Linear weight layout.
    Weights ~ N(0, 0.1) (as in the module __init__); small random biases."""
    k1, k2, k3, k4 = jax.random.split(key, 4)
    w1 = 0.1 * jax.random.normal(k1, (HIDDEN, s_dim), dtype=jnp.float32)
    b1 = 0.01 * jax.random.normal(k2, (HIDDEN,), dtype=jnp.float32)
    w2 = 0.1 * jax.random.normal(k3, (1, HIDDEN), dtype=jnp.float32)
    b2 = 0.01 * jax.random.normal(k4, (1,), dtype=jnp.float32)
    return w1, b1, w2, b2


def reference_forward(x, w1, b1, w2, b2):
    h = jnp.maximum(x @ w1.T + b1, 0.0)
    return h @ w2.T + b2


if __name__ == "__main__":
    key = jax.random.PRNGKey(0)
    s_dim = 3          # Pendulum-v1 observation dim
    batch = 8

    kx, kp, kb = jax.random.split(key, 3)
    w1, b1, w2, b2 = init_params(kp, s_dim)

    # Small per-env-step batch: single grid block.
    x = jax.random.normal(kx, (batch, s_dim), dtype=jnp.float32)
    out = jax.block_until_ready(critic_forward(x, w1, b1, w2, b2))
    ref = reference_forward(x, w1, b1, w2, b2)
    assert out.shape == (batch, 1)
    assert jnp.allclose(out, ref, atol=1e-4, rtol=1e-4)

    # Larger batch exercises the multi-block "parallel" grid + row-padding path
    # (B=1000 -> 2 blocks of 512, so both v7x TensorCores get work).
    xb = jax.random.normal(kb, (1000, s_dim), dtype=jnp.float32)
    outb = jax.block_until_ready(critic_forward(xb, w1, b1, w2, b2))
    refb = reference_forward(xb, w1, b1, w2, b2)
    assert outb.shape == (1000, 1)
    assert jnp.allclose(outb, refb, atol=1e-4, rtol=1e-4)

    print("KERNEL_OK")
</pallas_src>

<mosaic_0001>
module attributes {stable_mosaic.version = 11 : i64} {
  func.func @critic_kernel(%arg0: i32, %arg1: memref<128x3xf32, #tpu.memory_space<vmem>>, %arg2: memref<30x3xf32, #tpu.memory_space<vmem>>, %arg3: memref<30x1xf32, #tpu.memory_space<vmem>>, %arg4: memref<1x30xf32, #tpu.memory_space<vmem>>, %arg5: memref<1x1xf32, #tpu.memory_space<smem>>, %arg6: memref<1x128xf32, #tpu.memory_space<vmem>>) attributes {dimension_semantics = [#tpu.dimension_semantics<parallel>], iteration_bounds = array<i64: 1>, scalar_prefetch = 0 : i64, scratch_operands = 0 : i64, tpu.core_type = #tpu.core_type<tc>, window_params = [{transform_indices = @transform_0, window_bounds = array<i64: 128, 3>}, {pipeline_mode = #tpu.pipeline_mode<synchronous>, transform_indices = @transform_1, window_bounds = array<i64: 30, 3>}, {pipeline_mode = #tpu.pipeline_mode<synchronous>, transform_indices = @transform_2, window_bounds = array<i64: 30, 1>}, {pipeline_mode = #tpu.pipeline_mode<synchronous>, transform_indices = @transform_3, window_bounds = array<i64: 1, 30>}, {transform_indices = @transform_4, window_bounds = array<i64: 1, 1>}, {transform_indices = @transform_5, window_bounds = array<i64: 1, 128>}]} {
    %c0 = arith.constant 0 : index
    %c0_0 = arith.constant 0 : index
    %0 = vector.load %arg2[%c0, %c0_0] : memref<30x3xf32, #tpu.memory_space<vmem>>, vector<30x3xf32>
    %c0_1 = arith.constant 0 : index
    %c0_2 = arith.constant 0 : index
    %1 = vector.load %arg1[%c0_1, %c0_2] : memref<128x3xf32, #tpu.memory_space<vmem>>, vector<128x3xf32>
    %cst = arith.constant dense<0.000000e+00> : vector<30x128xf32>
    %2 = tpu.matmul %0, %1, %cst {dimension_numbers = #tpu.dot_dimension_numbers<[1], [1], [0], [0], [0, 0, 1, 0], [], []>} : vector<30x3xf32>, vector<128x3xf32>, vector<30x128xf32> -> vector<30x128xf32>
    %c0_3 = arith.constant 0 : index
    %c0_4 = arith.constant 0 : index
    %3 = vector.load %arg3[%c0_3, %c0_4] : memref<30x1xf32, #tpu.memory_space<vmem>>, vector<30x1xf32>
    %4 = vector.broadcast %3 : vector<30x1xf32> to vector<30x128xf32>
    %5 = arith.addf %2, %4 : vector<30x128xf32>
    %cst_5 = arith.constant 0.000000e+00 : f32
    %6 = vector.broadcast %cst_5 : f32 to vector<30x128xf32>
    %7 = arith.maximumf %5, %6 : vector<30x128xf32>
    %c0_6 = arith.constant 0 : index
    %c0_7 = arith.constant 0 : index
    %8 = vector.load %arg4[%c0_6, %c0_7] : memref<1x30xf32, #tpu.memory_space<vmem>>, vector<1x30xf32>
    %cst_8 = arith.constant dense<0.000000e+00> : vector<1x128xf32>
    %9 = tpu.matmul %8, %7, %cst_8 {dimension_numbers = #tpu.dot_dimension_numbers<[1], [0], [0], [1], [0, 0, 1, 1], [], []>} : vector<1x30xf32>, vector<30x128xf32>, vector<1x128xf32> -> vector<1x128xf32>
    %c0_9 = arith.constant 0 : index
    %c0_10 = arith.constant 0 : index
    %10 = memref.load %arg5[%c0_9, %c0_10] : memref<1x1xf32, #tpu.memory_space<smem>>
    %11 = vector.broadcast %10 : f32 to vector<1x128xf32>
    %12 = arith.addf %9, %11 : vector<1x128xf32>
    %c0_11 = arith.constant 0 : index
    %c0_12 = arith.constant 0 : index
    %13 = vector.load %arg6[%c0_11, %c0_12] : memref<1x128xf32, #tpu.memory_space<vmem>>, vector<1x128xf32>
    tpu.vector_store %arg6[%c0_11, %c0_12], %12 {strides = array<i32>} : memref<1x128xf32, #tpu.memory_space<vmem>>, vector<1x128xf32>,
    return
  }
  func.func @transform_0(%arg0: i32) -> (i32, i32) {
    %c0_i32 = arith.constant 0 : i32
    %c0_i32_0 = arith.constant 0 : i32
    return %arg0, %c0_i32 : i32, i32
  }
  func.func @transform_1(%arg0: i32) -> (i32, i32) {
    %c0_i32 = arith.constant 0 : i32
    %c0_i32_0 = arith.constant 0 : i32
    %c0_i32_1 = arith.constant 0 : i32
    return %c0_i32, %c0_i32_0 : i32, i32
  }
  func.func @transform_2(%arg0: i32) -> (i32, i32) {
    %c0_i32 = arith.constant 0 : i32
    %c0_i32_0 = arith.constant 0 : i32
    %c0_i32_1 = arith.constant 0 : i32
    return %c0_i32, %c0_i32_0 : i32, i32
  }
  func.func @transform_3(%arg0: i32) -> (i32, i32) {
    %c0_i32 = arith.constant 0 : i32
    %c0_i32_0 = arith.constant 0 : i32
    %c0_i32_1 = arith.constant 0 : i32
    return %c0_i32, %c0_i32_0 : i32, i32
  }
  func.func @transform_4(%arg0: i32) -> (i32, i32) {
    %c0_i32 = arith.constant 0 : i32
    %c0_i32_0 = arith.constant 0 : i32
    %c0_i32_1 = arith.constant 0 : i32
    return %c0_i32, %c0_i32_0 : i32, i32
  }
  func.func @transform_5(%arg0: i32) -> (i32, i32) {
    %c0_i32 = arith.constant 0 : i32
    %c0_i32_0 = arith.constant 0 : i32
    return %c0_i32, %arg0 : i32, i32
  }
}

</mosaic_0001>

<llo_original>
// kernel: _critic_forward_impl.1
$region0: #{_critic_forward_impl.1}
  #allocation0 [shape = 'u32[]', space=smem, size = 0x4, offset = 0x4, fixed_abs, tag = 'smem constant byte address 0x4 - core index']
  #allocation1 [shape = 'u32[144,128]{1,0:T(1,128)}', space=vmem, size = 0x12000, scoped, tag = 'internal scratch']
  #allocation2 [shape = 'f32[1,1]{1,0:T(1,128)S(6)}', space=smem, size = 0x200, scoped, tag = 'scoped memory for _critic_forward_impl.1']
  %s0 = inlined_call_operand.vmem [shape: f32[128,3], index: 0, kind: input, shape index: {}]
  %s1 = inlined_call_operand.vmem [shape: f32[30,3], index: 1, kind: input, shape index: {}]
  %s2 = inlined_call_operand.vmem [shape: f32[30,1], index: 2, kind: input, shape index: {}]
  %s3 = inlined_call_operand.vmem [shape: f32[1,30], index: 3, kind: input, shape index: {}]
  %s4 = inlined_call_operand.<no memory space> [shape: f32[1,1], index: 4, kind: input, shape index: {}]
  %s5 = inlined_call_operand.vmem [shape: f32[1,128], index: 5, kind: output, shape index: {}]
  %s6 = sld [smem:[#allocation0]]
  $region30: #{_critic_forward_impl.1} parent=0
    _
  %s8 = ssub.s32 1, %s6
  %s9 = scalar_select 0, %s8, %s6
  %10 = sst [smem:[#allocation2]] %s4
  // Predicated region
  $region2: #{_critic_forward_impl.1} parent=0 // pred_check
    _
  $region3: #{_critic_forward_impl.1} parent=0 // pred_check_branch
    %12 = sbr.rel (0) target = $region5
  $region4: #{_critic_forward_impl.1} parent=0 // pred_region
    _
  $region5: #{_critic_forward_impl.1} parent=0 // pred_fallthru
    _
  // Predicated region
  $region6: #{_critic_forward_impl.1} parent=0 // pred_check
    _
  $region7: #{_critic_forward_impl.1} parent=0 // pred_check_branch
    %14 = sbr.rel (0) target = $region9
  $region8: #{_critic_forward_impl.1} parent=0 // pred_region
    _
  $region9: #{_critic_forward_impl.1} parent=0 // pred_fallthru
    _
  // Predicated region
  $region10: #{_critic_forward_impl.1} parent=0 // pred_check
    _
  $region11: #{_critic_forward_impl.1} parent=0 // pred_check_branch
    %16 = sbr.rel (0) target = $region13
  $region12: #{_critic_forward_impl.1} parent=0 // pred_region
    _
  $region13: #{_critic_forward_impl.1} parent=0 // pred_fallthru
    _
  // Predicated region
  $region14: #{_critic_forward_impl.1} parent=0 // pred_check
    _
  $region15: #{_critic_forward_impl.1} parent=0 // pred_check_branch
    %18 = sbr.rel (0) target = $region17
  $region16: #{_critic_forward_impl.1} parent=0 // pred_region
    _
  $region17: #{_critic_forward_impl.1} parent=0 // pred_fallthru
    _
  // Predicated region
  $region18: #{_critic_forward_impl.1} parent=0 // pred_check
    _
  $region19: #{_critic_forward_impl.1} parent=0 // pred_check_branch
    %20 = sbr.rel (0) target = $region21
  $region20: #{_critic_forward_impl.1} parent=0 // pred_region
    _
  $region21: #{_critic_forward_impl.1} parent=0 // pred_fallthru
    _
  %v21 = vld [vmem:[%s1] sm:$0xff]
  %v22 = vld [vmem:[%s1 + $0x8] sm:$0xff]
  %v23 = vld [vmem:[%s1 + $0x10] sm:$0xff]
  %v24 = vld [vmem:[%s1 + $0x18] sm:$0x3f]
  %v25 = vld [vmem:[%s0] sm:$0xff]
  %v26 = vld [vmem:[%s0 + $0x8] sm:$0xff]
  %v27 = vld [vmem:[%s0 + $0x10] sm:$0xff]
  %v28 = vld [vmem:[%s0 + $0x18] sm:$0xff]
  %v29 = vld [vmem:[%s0 + $0x20] sm:$0xff]
  %v30 = vld [vmem:[%s0 + $0x28] sm:$0xff]
  %v31 = vld [vmem:[%s0 + $0x30] sm:$0xff]
  %v32 = vld [vmem:[%s0 + $0x38] sm:$0xff]
  %v33 = vld [vmem:[%s0 + $0x40] sm:$0xff]
  %v34 = vld [vmem:[%s0 + $0x48] sm:$0xff]
  %v35 = vld [vmem:[%s0 + $0x50] sm:$0xff]
  %v36 = vld [vmem:[%s0 + $0x58] sm:$0xff]
  %v37 = vld [vmem:[%s0 + $0x60] sm:$0xff]
  %v38 = vld [vmem:[%s0 + $0x68] sm:$0xff]
  %v39 = vld [vmem:[%s0 + $0x70] sm:$0xff]
  %v40 = vld [vmem:[%s0 + $0x78] sm:$0xff]
  %v41 = vld [vmem:[%s2] sm:$0xff]
  %v42 = vld [vmem:[%s2 + $0x8] sm:$0xff]
  %v43 = vld [vmem:[%s2 + $0x10] sm:$0xff]
  %v44 = vld [vmem:[%s2 + $0x18] sm:$0x3f]
  %46 = vset.pattern.permute.xlu0 0
  %47 = vperm.xlu0 %46, %v41
  %v48 = vpop.permute.xlu0 %47
  %51 = vset.pattern.permute.xlu0 0
  %52 = vperm.xlu0 %51, %v42
  %v53 = vpop.permute.xlu0 %52
  %56 = vset.pattern.permute.xlu0 0
  %57 = vperm.xlu0 %56, %v43
  %v58 = vpop.permute.xlu0 %57
  %61 = vset.pattern.permute.xlu0 0
  %62 = vperm.xlu0 %61, %v44
  %v63 = vpop.permute.xlu0 %62
  %vm65 = vcmask 23552
  %v67 = vsel %vm65, %v21, 0
  %v70 = vsel %vm65, %v22, 0
  %v73 = vsel %vm65, %v23, 0
  %v76 = vsel %vm65, %v24, 0
  %v79 = vsel %vm65, %v25, 0
  %v82 = vsel %vm65, %v26, 0
  %v85 = vsel %vm65, %v27, 0
  %v88 = vsel %vm65, %v28, 0
  %v91 = vsel %vm65, %v29, 0
  %v94 = vsel %vm65, %v30, 0
  %v97 = vsel %vm65, %v31, 0
  %v100 = vsel %vm65, %v32, 0
  %v103 = vsel %vm65, %v33, 0
  %v106 = vsel %vm65, %v34, 0
  %v109 = vsel %vm65, %v35, 0
  %v112 = vsel %vm65, %v36, 0
  %v115 = vsel %vm65, %v37, 0
  %v118 = vsel %vm65, %v38, 0
  %v121 = vsel %vm65, %v39, 0
  %v124 = vsel %vm65, %v40, 0
  %126 = vmatprep.subr.mxu0 0.0
  %127 = vmatpush1.xpose.msra.mxu0 %v79
  %128 = vmatprep.subr.mxu0 0.0
  %129 = vmatpush1.xpose.msra.mxu0 %v82
  %130 = vmatprep.subr.mxu0 0.0
  %131 = vmatpush1.xpose.msra.mxu0 %v85
  %132 = vmatprep.subr.mxu0 0.0
  %133 = vmatpush1.xpose.msra.mxu0 %v88
  %134 = vmatprep.subr.mxu0 0.0
  %135 = vmatpush1.xpose.msra.mxu0 %v91
  %136 = vmatprep.subr.mxu0 0.0
  %137 = vmatpush1.xpose.msra.mxu0 %v94
  %138 = vmatprep.subr.mxu0 0.0
  %139 = vmatpush1.xpose.msra.mxu0 %v97
  %140 = vmatprep.subr.mxu0 0.0
  %141 = vmatpush1.xpose.msra.mxu0 %v100
  %142 = vmatprep.subr.mxu0 0.0
  %143 = vmatpush1.xpose.msra.mxu0 %v103
  %144 = vmatprep.subr.mxu0 0.0
  %145 = vmatpush1.xpose.msra.mxu0 %v106
  %146 = vmatprep.subr.mxu0 0.0
  %147 = vmatpush1.xpose.msra.mxu0 %v109
  %148 = vmatprep.subr.mxu0 0.0
  %149 = vmatpush1.xpose.msra.mxu0 %v112
  %150 = vmatprep.subr.mxu0 0.0
  %151 = vmatpush1.xpose.msra.mxu0 %v115
  %152 = vmatprep.subr.mxu0 0.0
  %153 = vmatpush1.xpose.msra.mxu0 %v118
  %154 = vmatprep.subr.mxu0 0.0
  %155 = vmatpush1.xpose.msra.mxu0 %v121
  %156 = vmatprep.subr.mxu0 0.0
  %157 = vmatpush1.xpose.msra.mxu0 %v124
  %158 = vmatprep.subr.mxu0 0.0
  %159 = vmatpush1.xpose.msra.mxu0 0.0
  %160 = vmatprep.subr.mxu0 0.0
  %161 = vmatpush1.xpose.msra.mxu0 0.0
  %162 = vmatprep.subr.mxu0 0.0
  %163 = vmatpush1.xpose.msra.mxu0 0.0
  %164 = vmatprep.subr.mxu0 0.0
  %165 = vmatpush1.xpose.msra.mxu0 0.0
  %166 = vmatprep.subr.mxu0 0.0
  %167 = vmatpush1.xpose.msra.mxu0 0.0
  %168 = vmatprep.subr.mxu0 0.0
  %169 = vmatpush1.xpose.msra.mxu0 0.0
  %170 = vmatprep.subr.mxu0 0.0
  %171 = vmatpush1.xpose.msra.mxu0 0.0
  %172 = vmatprep.subr.mxu0 0.0
  %173 = vmatpush1.xpose.msra.mxu0 0.0
  %174 = vmatprep.subr.mxu0 0.0
  %175 = vmatpush1.xpose.msra.mxu0 0.0
  %176 = vmatprep.subr.mxu0 0.0
  %177 = vmatpush1.xpose.msra.mxu0 0.0
  %178 = vmatprep.subr.mxu0 0.0
  %179 = vmatpush1.xpose.msra.mxu0 0.0
  %180 = vmatprep.subr.mxu0 0.0
  %181 = vmatpush1.xpose.msra.mxu0 0.0
  %182 = vmatprep.subr.mxu0 0.0
  %183 = vmatpush1.xpose.msra.mxu0 0.0
  %184 = vmatprep.subr.mxu0 0.0
  %185 = vmatpush1.xpose.msra.mxu0 0.0
  %186 = vmatprep.subr.mxu0 0.0
  %187 = vmatpush1.xpose.msra.mxu0 0.0
  %188 = vmatprep.subr.mxu0 0.0
  %189 = vmatpush1.xpose.msra.mxu0 0.0
  %190 = vmatprep.mubr.f32.mxu0 0.0
  %191 = vmatmul.mubr.f32.gmra.mrb[0].mxu0 %v67
  %v192 = vpop.f32.mrb[0].mxu0
  %v193 = vadd.f32 %v48, %v192
  %v194 = vpop.f32.mrb[0].mxu0
  %195 = vmatprep.mubr.f32.mxu0 0.0
  %196 = vmatmul.mubr.f32.gmra.mrb[0].mxu0 %v70
  %v197 = vpop.f32.mrb[0].mxu0
  %v198 = vadd.f32 %v53, %v197
  %v199 = vpop.f32.mrb[0].mxu0
  %200 = vmatprep.mubr.f32.mxu0 0.0
  %201 = vmatmul.mubr.f32.gmra.mrb[0].mxu0 %v73
  %v202 = vpop.f32.mrb[0].mxu0
  %v203 = vadd.f32 %v58, %v202
  %v204 = vpop.f32.mrb[0].mxu0
  %205 = vmatprep.mubr.f32.mxu0 0.0
  %206 = vmatmul.mubr.f32.gmra.mrb[0].mxu0 %v76
  %v207 = vpop.f32.mrb[0].mxu0
  %v208 = vadd.f32 %v63, %v207
  %v209 = vpop.f32.mrb[0].mxu0
  %210 = vdwg.mxu0
  %v211 = vmax.f32 %v193, 0.0
  %v212 = vmax.f32 %v198, 0.0
  %v213 = vmax.f32 %v203, 0.0
  %v214 = vmax.f32 %v208, 0.0
  %v215 = vld [vmem:[%s3] sm:$0x1]
  %s216 = sld [smem:[#allocation2]]
  %v217 = vstv %s216
  %vm218 = vcmask 244736
  %v220 = vsel %vm218, %v215, 0
  %vm222 = vcmask 1045504
  %v224 = vsel %vm222, %v214, 0
  %226 = vmatprep.subr.mxu0 0.0
  %227 = vmatpush1.msra.mxu0 %v211
  %228 = vmatprep.subr.mxu0 0.0
  %229 = vmatpush1.msra.mxu0 %v212
  %230 = vmatprep.subr.mxu0 0.0
  %231 = vmatpush1.msra.mxu0 %v213
  %232 = vmatprep.subr.mxu0 0.0
  %233 = vmatpush1.msra.mxu0 %v224
  %234 = vmatprep.subr.mxu0 0.0
  %235 = vmatpush1.msra.mxu0 0.0
  %236 = vmatprep.subr.mxu0 0.0
  %237 = vmatpush1.msra.mxu0 0.0
  %238 = vmatprep.subr.mxu0 0.0
  %239 = vmatpush1.msra.mxu0 0.0
  %240 = vmatprep.subr.mxu0 0.0
  %241 = vmatpush1.msra.mxu0 0.0
  %242 = vmatprep.subr.mxu0 0.0
  %243 = vmatpush1.msra.mxu0 0.0
  %244 = vmatprep.subr.mxu0 0.0
  %245 = vmatpush1.msra.mxu0 0.0
  %246 = vmatprep.subr.mxu0 0.0
  %247 = vmatpush1.msra.mxu0 0.0
  %248 = vmatprep.subr.mxu0 0.0
  %249 = vmatpush1.msra.mxu0 0.0
  %250 = vmatprep.subr.mxu0 0.0
  %251 = vmatpush1.msra.mxu0 0.0
  %252 = vmatprep.subr.mxu0 0.0
  %253 = vmatpush1.msra.mxu0 0.0
  %254 = vmatprep.subr.mxu0 0.0
  %255 = vmatpush1.msra.mxu0 0.0
  %256 = vmatprep.subr.mxu0 0.0
  %257 = vmatpush1.msra.mxu0 0.0
  %258 = vmatprep.subr.mxu0 0.0
  %259 = vmatpush1.msra.mxu0 0.0
  %260 = vmatprep.subr.mxu0 0.0
  %261 = vmatpush1.msra.mxu0 0.0
  %262 = vmatprep.subr.mxu0 0.0
  %263 = vmatpush1.msra.mxu0 0.0
  %264 = vmatprep.subr.mxu0 0.0
  %265 = vmatpush1.msra.mxu0 0.0
  %266 = vmatprep.subr.mxu0 0.0
  %267 = vmatpush1.msra.mxu0 0.0
  %268 = vmatprep.subr.mxu0 0.0
  %269 = vmatpush1.msra.mxu0 0.0
  %270 = vmatprep.subr.mxu0 0.0
  %271 = vmatpush1.msra.mxu0 0.0
  %272 = vmatprep.subr.mxu0 0.0
  %273 = vmatpush1.msra.mxu0 0.0
  %274 = vmatprep.subr.mxu0 0.0
  %275 = vmatpush1.msra.mxu0 0.0
  %276 = vmatprep.subr.mxu0 0.0
  %277 = vmatpush1.msra.mxu0 0.0
  %278 = vmatprep.subr.mxu0 0.0
  %279 = vmatpush1.msra.mxu0 0.0
  %280 = vmatprep.subr.mxu0 0.0
  %281 = vmatpush1.msra.mxu0 0.0
  %282 = vmatprep.subr.mxu0 0.0
  %283 = vmatpush1.msra.mxu0 0.0
  %284 = vmatprep.subr.mxu0 0.0
  %285 = vmatpush1.msra.mxu0 0.0
  %286 = vmatprep.subr.mxu0 0.0
  %287 = vmatpush1.msra.mxu0 0.0
  %288 = vmatprep.subr.mxu0 0.0
  %289 = vmatpush1.msra.mxu0 0.0
  %290 = vmatprep.mubr.f32.mxu0 0.0
  %291 = vmatmul.mubr.f32.gmra.mrb[0].mxu0 %v220
  %v292 = vpop.f32.mrb[0].mxu0
  %v293 = vadd.f32 %v217, %v292
  %v294 = vpop.f32.mrb[0].mxu0
  %295 = vdwg.mxu0
  %296 = vst [vmem:[%s5] sm:$0x1] %v293
  // Predicated region
  $region22: #{_critic_forward_impl.1} parent=0 // pred_check
    _
  $region23: #{_critic_forward_impl.1} parent=0 // pred_check_branch
    %298 = sbr.rel (0) target = $region25
  $region24: #{_critic_forward_impl.1} parent=0 // pred_region
    _
  $region25: #{_critic_forward_impl.1} parent=0 // pred_fallthru
    _
  // Predicated region
  $region26: #{_critic_forward_impl.1} parent=0 // pred_check
    _
  $region27: #{_critic_forward_impl.1} parent=0 // pred_check_branch
    %300 = sbr.rel (0) target = $region29
  $region28: #{_critic_forward_impl.1} parent=0 // pred_region
    _
  $region29: #{_critic_forward_impl.1} parent=0 // pred_fallthru
    _

</llo_original>
